<compile_context>
chip_gen: v5e
topology: v5e:2x2
jax: 0.10.0
libtpu: 0.0.40
codegen_flags: <defaults>
</compile_context>

<pallas_src>
import jax
import jax.numpy as jnp
from jax.experimental import pallas as pl
from jax.experimental.pallas import tpu as pltpu


def _round_up(a, b):
    return (a + b - 1) // b * b


def resmlp_kernel(xt_ref, w1_ref, b1_ref, w2_ref, b2_ref, w3_ref, b3_ref, o_ref):
    # xt_ref: (C, Tn) tile of x^T -- the 128-wide lane axis carries the big row
    # dimension, so every load/store is a full, unmasked vld/vst.
    xt = xt_ref[...]                         # f32 copy kept for the residual
    xb = xt.astype(w1_ref.dtype)             # bf16 operand for the MXU

    # linear1 + relu:  (H, C) @ (C, Tn) -> (H, Tn), f32 accumulation on the MXU.
    h = jnp.dot(w1_ref[...], xb, preferred_element_type=jnp.float32) + b1_ref[...]
    h = jnp.maximum(h, 0.0)

    # linear2 + relu:  (H, H) @ (H, Tn) -> (H, Tn)
    h = jnp.dot(w2_ref[...], h.astype(w2_ref.dtype),
                preferred_element_type=jnp.float32) + b2_ref[...]
    h = jnp.maximum(h, 0.0)

    # linear3 + relu:  (C, H) @ (H, Tn) -> (C, Tn)
    y = jnp.dot(w3_ref[...], h.astype(w3_ref.dtype),
                preferred_element_type=jnp.float32) + b3_ref[...]
    y = jnp.maximum(y, 0.0)

    # Residual add in f32 (fast VPU path on all gens incl. v5e); lane-dense store.
    o_ref[...] = (xt.astype(jnp.float32) + y).astype(o_ref.dtype)


def _choose_tile_n(N, C, H, *, tile_n_cap=8192, vmem_budget=40 * 1024 * 1024,
                   w_bytes=2):
    """Pick the row-tile width (multiple of 128 lanes), sized against VMEM and N."""
    Np128 = _round_up(max(N, 1), 128)
    # Resident weights/biases (single Buffered(1) copy).
    resident_w = (H * C + H * H + C * H) * w_bytes + (2 * H + C) * 4
    # Bytes per lane-column: double-buffered f32 in + out tiles (8*C each) plus
    # ~4 live (H, tn) f32 intermediates worth of compute scratch.
    bytes_per_col = 16 * C + 16 * H
    tn_vmem = max(vmem_budget - resident_w, 0) // max(bytes_per_col, 1)
    # Keep >= 2 grid steps when N allows so the "parallel" axis can shard across
    # v7x's two TensorCores (v5e/v6e have one TC, so this costs nothing there).
    tn_core = _round_up(pl.cdiv(Np128, 2), 128) if Np128 >= 256 else Np128
    tn = min(tile_n_cap, tn_vmem, tn_core, Np128)
    tn = max(128, (tn // 128) * 128)
    return tn


def _vmem_limit_bytes(C, H, tn, *, w_bytes=2):
    """Explicit VMEM estimate; 2x headroom, clamped below v7x's 64 MiB physical."""
    io = 2 * 2 * C * tn * 4                                   # 2-buf f32 in + out tiles
    weights = (H * C + H * H + C * H) * w_bytes + (2 * H + C) * 4   # Buffered(1) resident
    inter = 4 * H * tn * 4                                    # f32 intermediates / scratch
    est = io + weights + inter
    return int(min(max(2 * est, 32 * 1024 * 1024), 56 * 1024 * 1024))


def resmlp_pallas(x, w1, b1, w2, b2, w3, b3, *, tile_n_cap=8192,
                  compute_dtype=jnp.bfloat16):
    """ResMLP forward.

    x : (..., C) features-last, exactly as the PyTorch module sees it.
    Weights in PyTorch nn.Linear layout (out_features, in_features):
      w1: (H, C)  b1: (H,)
      w2: (H, H)  b2: (H,)
      w3: (C, H)  b3: (C,)
    """
    orig_shape = x.shape
    C = orig_shape[-1]
    H = w1.shape[0]
    assert w1.shape == (H, C) and w2.shape == (H, H) and w3.shape == (C, H)

    # Flatten leading dims into rows.
    xf = x.reshape(-1, C)
    N = xf.shape[0]

    w_bytes = jnp.dtype(compute_dtype).itemsize
    tn = _choose_tile_n(N, C, H, tile_n_cap=tile_n_cap, w_bytes=w_bytes)
    Np = _round_up(N, tn)

    # Pad ragged rows BEFORE the transpose so XLA fuses pad + transpose into a
    # single HBM pass, then go features-first (C, N): the 128-lane axis carries
    # the big N dimension (lane-dense, unmasked stores in the kernel).
    if Np != N:
        xf = jnp.pad(xf, ((0, Np - N), (0, 0)))
    xt = xf.T                                   # (C, Np)
    grid = (Np // tn,)

    # Weights cast to the MXU compute dtype once; biases stay f32 (dim, 1) columns.
    w1c = w1.astype(compute_dtype)
    w2c = w2.astype(compute_dtype)
    w3c = w3.astype(compute_dtype)
    b1c = b1.reshape(H, 1).astype(jnp.float32)
    b2c = b2.reshape(H, 1).astype(jnp.float32)
    b3c = b3.reshape(C, 1).astype(jnp.float32)

    # Constant-index weight/bias blocks: single resident buffer (Buffered(1)),
    # no dead double-buffers eating VMEM.
    def resident(shape):
        return pl.BlockSpec(shape, lambda i: (0, 0), pipeline_mode=pl.Buffered(1))

    out_t = pl.pallas_call(
        resmlp_kernel,
        out_shape=jax.ShapeDtypeStruct((C, Np), x.dtype),
        grid_spec=pltpu.PrefetchScalarGridSpec(
            num_scalar_prefetch=0,
            grid=grid,
            in_specs=[
                pl.BlockSpec((C, tn), lambda i: (0, i)),   # x^T tile (lane-dense)
                resident((H, C)),    # w1
                resident((H, 1)),    # b1
                resident((H, H)),    # w2
                resident((H, 1)),    # b2
                resident((C, H)),    # w3
                resident((C, 1)),    # b3
            ],
            out_specs=pl.BlockSpec((C, tn), lambda i: (0, i)),  # lane-dense store
        ),
        compiler_params=pltpu.CompilerParams(
            dimension_semantics=("parallel",),   # row tiles shard across TCs (v7x)
            vmem_limit_bytes=_vmem_limit_bytes(C, H, tn, w_bytes=w_bytes),
        ),
    )(xt, w1c, b1c, w2c, b2c, w3c, b3c)

    out = out_t[:, :N].T.reshape(orig_shape)
    return out


def init_params(key, num_channels, num_hidden):
    """Deterministic init mimicking nn.Linear default (uniform +-1/sqrt(fan_in)),
    in PyTorch (out_features, in_features) weight layout."""
    ks = jax.random.split(key, 6)

    def linear(kw, kb, fan_in, fan_out):
        bound = 1.0 / (fan_in ** 0.5)
        w = jax.random.uniform(kw, (fan_out, fan_in), jnp.float32, -bound, bound)
        b = jax.random.uniform(kb, (fan_out,), jnp.float32, -bound, bound)
        return w, b

    w1, b1 = linear(ks[0], ks[1], num_channels, num_hidden)
    w2, b2 = linear(ks[2], ks[3], num_hidden, num_hidden)
    w3, b3 = linear(ks[4], ks[5], num_hidden, num_channels)
    return w1, b1, w2, b2, w3, b3


def resmlp_ref(x, w1, b1, w2, b2, w3, b3):
    h = jnp.maximum(x @ w1.T + b1, 0.0)
    h = jnp.maximum(h @ w2.T + b2, 0.0)
    y = jnp.maximum(h @ w3.T + b3, 0.0)
    return x + y


if __name__ == "__main__":
    num_channels = 8
    num_hidden = 32
    batch, tokens = 4, 512      # N = 2048 rows -> tn = 1024, grid = (2,)

    key = jax.random.PRNGKey(0)
    kx, kp = jax.random.split(key)
    x = jax.random.normal(kx, (batch, tokens, num_channels), dtype=jnp.float32)
    params = init_params(kp, num_channels, num_hidden)

    out = jax.block_until_ready(resmlp_pallas(x, *params))
    ref = resmlp_ref(x, *params)

    assert out.shape == x.shape
    # bf16 MXU operands vs. the pure-f32 reference -> loosened tolerance.
    max_err = float(jnp.max(jnp.abs(out - ref)))
    assert jnp.allclose(out, ref, atol=5e-2, rtol=5e-2), max_err

    print("KERNEL_OK")
</pallas_src>

<mosaic_0001>
module attributes {stable_mosaic.version = 11 : i64} {
  func.func @resmlp_kernel(%arg0: i32, %arg1: memref<8x1024xf32, #tpu.memory_space<vmem>>, %arg2: memref<32x8xbf16, #tpu.memory_space<vmem>>, %arg3: memref<32x1xf32, #tpu.memory_space<vmem>>, %arg4: memref<32x32xbf16, #tpu.memory_space<vmem>>, %arg5: memref<32x1xf32, #tpu.memory_space<vmem>>, %arg6: memref<8x32xbf16, #tpu.memory_space<vmem>>, %arg7: memref<8x1xf32, #tpu.memory_space<vmem>>, %arg8: memref<8x1024xf32, #tpu.memory_space<vmem>>) attributes {dimension_semantics = [#tpu.dimension_semantics<parallel>], iteration_bounds = array<i64: 2>, scalar_prefetch = 0 : i64, scratch_operands = 0 : i64, tpu.core_type = #tpu.core_type<tc>, window_params = [{transform_indices = @transform_0, window_bounds = array<i64: 8, 1024>}, {pipeline_mode = #tpu.pipeline_mode<synchronous>, transform_indices = @transform_1, window_bounds = array<i64: 32, 8>}, {pipeline_mode = #tpu.pipeline_mode<synchronous>, transform_indices = @transform_2, window_bounds = array<i64: 32, 1>}, {pipeline_mode = #tpu.pipeline_mode<synchronous>, transform_indices = @transform_3, window_bounds = array<i64: 32, 32>}, {pipeline_mode = #tpu.pipeline_mode<synchronous>, transform_indices = @transform_4, window_bounds = array<i64: 32, 1>}, {pipeline_mode = #tpu.pipeline_mode<synchronous>, transform_indices = @transform_5, window_bounds = array<i64: 8, 32>}, {pipeline_mode = #tpu.pipeline_mode<synchronous>, transform_indices = @transform_6, window_bounds = array<i64: 8, 1>}, {transform_indices = @transform_7, window_bounds = array<i64: 8, 1024>}]} {
    %c0 = arith.constant 0 : index
    %c0_0 = arith.constant 0 : index
    %0 = vector.load %arg1[%c0, %c0_0] : memref<8x1024xf32, #tpu.memory_space<vmem>>, vector<8x1024xf32>
    %1 = arith.truncf %0 : vector<8x1024xf32> to vector<8x1024xbf16>
    %c0_1 = arith.constant 0 : index
    %c0_2 = arith.constant 0 : index
    %2 = vector.load %arg2[%c0_1, %c0_2] : memref<32x8xbf16, #tpu.memory_space<vmem>>, vector<32x8xbf16>
    %cst = arith.constant dense<0.000000e+00> : vector<32x1024xf32>
    %3 = tpu.matmul %2, %1, %cst {dimension_numbers = #tpu.dot_dimension_numbers<[1], [0], [0], [1], [0, 0, 1, 1], [], []>} : vector<32x8xbf16>, vector<8x1024xbf16>, vector<32x1024xf32> -> vector<32x1024xf32>
    %c0_3 = arith.constant 0 : index
    %c0_4 = arith.constant 0 : index
    %4 = vector.load %arg3[%c0_3, %c0_4] : memref<32x1xf32, #tpu.memory_space<vmem>>, vector<32x1xf32>
    %5 = vector.broadcast %4 : vector<32x1xf32> to vector<32x1024xf32>
    %6 = arith.addf %3, %5 : vector<32x1024xf32>
    %cst_5 = arith.constant 0.000000e+00 : f32
    %7 = vector.broadcast %cst_5 : f32 to vector<32x1024xf32>
    %8 = arith.maximumf %6, %7 : vector<32x1024xf32>
    %c0_6 = arith.constant 0 : index
    %c0_7 = arith.constant 0 : index
    %9 = vector.load %arg4[%c0_6, %c0_7] : memref<32x32xbf16, #tpu.memory_space<vmem>>, vector<32x32xbf16>
    %10 = arith.truncf %8 : vector<32x1024xf32> to vector<32x1024xbf16>
    %cst_8 = arith.constant dense<0.000000e+00> : vector<32x1024xf32>
    %11 = tpu.matmul %9, %10, %cst_8 {dimension_numbers = #tpu.dot_dimension_numbers<[1], [0], [0], [1], [0, 0, 1, 1], [], []>} : vector<32x32xbf16>, vector<32x1024xbf16>, vector<32x1024xf32> -> vector<32x1024xf32>
    %c0_9 = arith.constant 0 : index
    %c0_10 = arith.constant 0 : index
    %12 = vector.load %arg5[%c0_9, %c0_10] : memref<32x1xf32, #tpu.memory_space<vmem>>, vector<32x1xf32>
    %13 = vector.broadcast %12 : vector<32x1xf32> to vector<32x1024xf32>
    %14 = arith.addf %11, %13 : vector<32x1024xf32>
    %cst_11 = arith.constant 0.000000e+00 : f32
    %15 = vector.broadcast %cst_11 : f32 to vector<32x1024xf32>
    %16 = arith.maximumf %14, %15 : vector<32x1024xf32>
    %c0_12 = arith.constant 0 : index
    %c0_13 = arith.constant 0 : index
    %17 = vector.load %arg6[%c0_12, %c0_13] : memref<8x32xbf16, #tpu.memory_space<vmem>>, vector<8x32xbf16>
    %18 = arith.truncf %16 : vector<32x1024xf32> to vector<32x1024xbf16>
    %cst_14 = arith.constant dense<0.000000e+00> : vector<8x1024xf32>
    %19 = tpu.matmul %17, %18, %cst_14 {dimension_numbers = #tpu.dot_dimension_numbers<[1], [0], [0], [1], [0, 0, 1, 1], [], []>} : vector<8x32xbf16>, vector<32x1024xbf16>, vector<8x1024xf32> -> vector<8x1024xf32>
    %c0_15 = arith.constant 0 : index
    %c0_16 = arith.constant 0 : index
    %20 = vector.load %arg7[%c0_15, %c0_16] : memref<8x1xf32, #tpu.memory_space<vmem>>, vector<8x1xf32>
    %21 = vector.broadcast %20 : vector<8x1xf32> to vector<8x1024xf32>
    %22 = arith.addf %19, %21 : vector<8x1024xf32>
    %cst_17 = arith.constant 0.000000e+00 : f32
    %23 = vector.broadcast %cst_17 : f32 to vector<8x1024xf32>
    %24 = arith.maximumf %22, %23 : vector<8x1024xf32>
    %25 = arith.addf %0, %24 : vector<8x1024xf32>
    %c0_18 = arith.constant 0 : index
    %c0_19 = arith.constant 0 : index
    %26 = vector.load %arg8[%c0_18, %c0_19] : memref<8x1024xf32, #tpu.memory_space<vmem>>, vector<8x1024xf32>
    tpu.vector_store %arg8[%c0_18, %c0_19], %25 {strides = array<i32>} : memref<8x1024xf32, #tpu.memory_space<vmem>>, vector<8x1024xf32>,
    return
  }
  func.func @transform_0(%arg0: i32) -> (i32, i32) {
    %c0_i32 = arith.constant 0 : i32
    %c0_i32_0 = arith.constant 0 : i32
    return %c0_i32, %arg0 : i32, i32
  }
  func.func @transform_1(%arg0: i32) -> (i32, i32) {
    %c0_i32 = arith.constant 0 : i32
    %c0_i32_0 = arith.constant 0 : i32
    %c0_i32_1 = arith.constant 0 : i32
    return %c0_i32, %c0_i32_0 : i32, i32
  }
  func.func @transform_2(%arg0: i32) -> (i32, i32) {
    %c0_i32 = arith.constant 0 : i32
    %c0_i32_0 = arith.constant 0 : i32
    %c0_i32_1 = arith.constant 0 : i32
    return %c0_i32, %c0_i32_0 : i32, i32
  }
  func.func @transform_3(%arg0: i32) -> (i32, i32) {
    %c0_i32 = arith.constant 0 : i32
    %c0_i32_0 = arith.constant 0 : i32
    %c0_i32_1 = arith.constant 0 : i32
    return %c0_i32, %c0_i32_0 : i32, i32
  }
  func.func @transform_4(%arg0: i32) -> (i32, i32) {
    %c0_i32 = arith.constant 0 : i32
    %c0_i32_0 = arith.constant 0 : i32
    %c0_i32_1 = arith.constant 0 : i32
    return %c0_i32, %c0_i32_0 : i32, i32
  }
  func.func @transform_5(%arg0: i32) -> (i32, i32) {
    %c0_i32 = arith.constant 0 : i32
    %c0_i32_0 = arith.constant 0 : i32
    %c0_i32_1 = arith.constant 0 : i32
    return %c0_i32, %c0_i32_0 : i32, i32
  }
  func.func @transform_6(%arg0: i32) -> (i32, i32) {
    %c0_i32 = arith.constant 0 : i32
    %c0_i32_0 = arith.constant 0 : i32
    %c0_i32_1 = arith.constant 0 : i32
    return %c0_i32, %c0_i32_0 : i32, i32
  }
  func.func @transform_7(%arg0: i32) -> (i32, i32) {
    %c0_i32 = arith.constant 0 : i32
    %c0_i32_0 = arith.constant 0 : i32
    return %c0_i32, %arg0 : i32, i32
  }
}

</mosaic_0001>

<llo_original>
// kernel: tpu_custom_call.1
$region0: #{tpu_custom_call.1}
  #allocation0 [shape = 'u32[]', space=smem, size = 0x4, offset = 0x4, fixed_abs, tag = 'smem constant byte address 0x4 - core index']
  #allocation1 [shape = 'u32[72,128]{1,0:T(1,128)}', space=vmem, size = 0x9000, scoped, tag = 'internal scratch']
  %s0 = inlined_call_operand.hbm [shape: f32[8,2048], index: 0, kind: input, shape index: {}]
  %s1 = inlined_call_operand.vmem [shape: bf16[32,8], index: 1, kind: input, shape index: {}]
  %s2 = inlined_call_operand.vmem [shape: f32[32,1], index: 2, kind: input, shape index: {}]
  %s3 = inlined_call_operand.vmem [shape: bf16[32,32], index: 3, kind: input, shape index: {}]
  %s4 = inlined_call_operand.vmem [shape: f32[32,1], index: 4, kind: input, shape index: {}]
  %s5 = inlined_call_operand.vmem [shape: bf16[8,32], index: 5, kind: input, shape index: {}]
  %s6 = inlined_call_operand.vmem [shape: f32[8,1], index: 6, kind: input, shape index: {}]
  %s7 = inlined_call_operand.hbm [shape: f32[8,2048], index: 7, kind: output, shape index: {}]
  %s8 = sld [smem:[#allocation0]]
  $region65: #{tpu_custom_call.1} parent=0
    _
  %s10 = ssub.s32 1, %s8
  %s11 = scalar_select 0, %s10, %s8
  $region1: #{tpu_custom_call.1} parent=0
    #allocation2 [shape = 'u8[65536]{0}', space=vmem, size = 0x10000, scoped, tag = 'input window, operand 0']
    #allocation3 [shape = 's32[2]{0}', space=sflag, size = 0x8, scoped, tag = 'scoped memory for tpu_custom_call.1']
    #allocation4 [shape = 's32[2]{0}', space=sflag, size = 0x8, scoped, tag = 'scoped memory for tpu_custom_call.1']
    #allocation5 [shape = 'u8[65536]{0}', space=vmem, size = 0x10000, scoped, tag = 'output window, operand 0']
    %12 = vsyncpa [#allocation3], 0
    %s13 = scalar_lea.sflag [#allocation3], 1
    %14 = vsyncpa %s13, 0
    %15 = vsyncpa [#allocation4], 0
    %s16 = scalar_lea.sflag [#allocation4], 1
    %17 = vsyncpa %s16, 0
    loop: start=0, step=1, limit=4
    $region2: #{tpu_custom_call.1} parent=1 // loop_pre_header
      _
    $region3: #{tpu_custom_call.1} parent=1 // loop_header
      %s19 = sphi 0, %s23
      %p20 = scmp.ge.s32.totalorder %s19, 4
      %s29 = sphi 0, %s31
      %s32 = sphi 0, %s29
      %s33 = sphi 0, %s32
      %s49 = sphi 0, %s33
      %s53 = sphi 0, %s53
      %s55 = sphi 0, %s53
      %s56 = sphi 0, %s55
      %s70 = sphi 0, %s56
      %s74 = sphi 0, %s74
      %s76 = sphi 0, %s74
      %s77 = sphi 0, %s76
      %s91 = sphi 0, %s77
      %s95 = sphi 0, %s95
      %s97 = sphi 0, %s95
      %s98 = sphi 0, %s97
      %s112 = sphi 0, %s98
      %s116 = sphi 0, %s116
      %s118 = sphi 0, %s116
      %s119 = sphi 0, %s118
      %s133 = sphi 0, %s119
      %s137 = sphi 0, %s137
      %s139 = sphi 0, %s137
      %s140 = sphi 0, %s139
      %s154 = sphi 0, %s140
      %s158 = sphi 0, %s158
      %s160 = sphi 0, %s158
      %s161 = sphi 0, %s160
      %s175 = sphi 0, %s161
      %s181 = sphi 0, %s183
      %s184 = sphi 0, %s181
      %s185 = sphi 0, %s184
      %s201 = sphi 0, %s185
    $region4: #{tpu_custom_call.1} parent=1 // loop_header_branch
      %22 = sbr.rel (%p20) target = $region8
    $region5: #{tpu_custom_call.1} parent=1 // loop_body
      %s24 = ssub.s32 %s19, 1
      %s25 = ssub.s32 %s19, 2
      %s26 = sadd.s32 %s19, 1
      %s27 = ssub.s32 %s19, %s26
      %p28 = scmp.eq.s32.totalorder %s27, 0
      %s30 = sadd.s32 %s29, 1
      %s31 = scalar_select %p28, %s29, %s30
      %p34 = pneg %p28
      %p35 = scmp.eq.s32.totalorder %s19, 1
      %p36 = por %p34, %p35
      %p37 = scmp.ne.s32.totalorder %s29, %s32
      %p38 = scmp.eq.s32.totalorder %s19, 0
      %p39 = por %p37, %p38
      %p40 = scmp.ne.s32.totalorder %s29, %s32
      %p41 = scmp.eq.s32.totalorder %s24, 1
      %p42 = por %p40, %p41
      %p43 = scmp.ne.s32.totalorder %s32, %s33
      %p44 = scmp.eq.s32.totalorder %s24, 0
      %p45 = por %p43, %p44
      %p46 = scmp.ne.s32.totalorder %s32, %s33
      %p47 = scmp.eq.s32.totalorder %s25, 1
      %p48 = por %p46, %p47
      %p50 = scmp.ne.s32.totalorder %s33, %s49
      %p51 = scmp.eq.s32.totalorder %s25, 0
      %p52 = por %p50, %p51
      %s54 = sadd.s32 %s53, 1
      %p57 = scmp.eq.s32.totalorder %s19, 1
      %p58 = scmp.ne.s32.totalorder %s53, %s55
      %p59 = scmp.eq.s32.totalorder %s19, 0
      %p60 = por %p58, %p59
      %p61 = scmp.ne.s32.totalorder %s53, %s55
      %p62 = scmp.eq.s32.totalorder %s24, 1
      %p63 = por %p61, %p62
      %p64 = scmp.ne.s32.totalorder %s55, %s56
      %p65 = scmp.eq.s32.totalorder %s24, 0
      %p66 = por %p64, %p65
      %p67 = scmp.ne.s32.totalorder %s55, %s56
      %p68 = scmp.eq.s32.totalorder %s25, 1
      %p69 = por %p67, %p68
      %p71 = scmp.ne.s32.totalorder %s56, %s70
      %p72 = scmp.eq.s32.totalorder %s25, 0
      %p73 = por %p71, %p72
      %s75 = sadd.s32 %s74, 1
      %p78 = scmp.eq.s32.totalorder %s19, 1
      %p79 = scmp.ne.s32.totalorder %s74, %s76
      %p80 = scmp.eq.s32.totalorder %s19, 0
      %p81 = por %p79, %p80
      %p82 = scmp.ne.s32.totalorder %s74, %s76
      %p83 = scmp.eq.s32.totalorder %s24, 1
      %p84 = por %p82, %p83
      %p85 = scmp.ne.s32.totalorder %s76, %s77
      %p86 = scmp.eq.s32.totalorder %s24, 0
      %p87 = por %p85, %p86
      %p88 = scmp.ne.s32.totalorder %s76, %s77
      %p89 = scmp.eq.s32.totalorder %s25, 1
      %p90 = por %p88, %p89
      %p92 = scmp.ne.s32.totalorder %s77, %s91
      %p93 = scmp.eq.s32.totalorder %s25, 0
      %p94 = por %p92, %p93
      %s96 = sadd.s32 %s95, 1
      %p99 = scmp.eq.s32.totalorder %s19, 1
      %p100 = scmp.ne.s32.totalorder %s95, %s97
      %p101 = scmp.eq.s32.totalorder %s19, 0
      %p102 = por %p100, %p101
      %p103 = scmp.ne.s32.totalorder %s95, %s97
      %p104 = scmp.eq.s32.totalorder %s24, 1
      %p105 = por %p103, %p104
      %p106 = scmp.ne.s32.totalorder %s97, %s98
      %p107 = scmp.eq.s32.totalorder %s24, 0
      %p108 = por %p106, %p107
      %p109 = scmp.ne.s32.totalorder %s97, %s98
      %p110 = scmp.eq.s32.totalorder %s25, 1
      %p111 = por %p109, %p110
      %p113 = scmp.ne.s32.totalorder %s98, %s112
      %p114 = scmp.eq.s32.totalorder %s25, 0
      %p115 = por %p113, %p114
      %s117 = sadd.s32 %s116, 1
      %p120 = scmp.eq.s32.totalorder %s19, 1
      %p121 = scmp.ne.s32.totalorder %s116, %s118
      %p122 = scmp.eq.s32.totalorder %s19, 0
      %p123 = por %p121, %p122
      %p124 = scmp.ne.s32.totalorder %s116, %s118
      %p125 = scmp.eq.s32.totalorder %s24, 1
      %p126 = por %p124, %p125
      %p127 = scmp.ne.s32.totalorder %s118, %s119
      %p128 = scmp.eq.s32.totalorder %s24, 0
      %p129 = por %p127, %p128
      %p130 = scmp.ne.s32.totalorder %s118, %s119
      %p131 = scmp.eq.s32.totalorder %s25, 1
      %p132 = por %p130, %p131
      %p134 = scmp.ne.s32.totalorder %s119, %s133
      %p135 = scmp.eq.s32.totalorder %s25, 0
      %p136 = por %p134, %p135
      %s138 = sadd.s32 %s137, 1
      %p141 = scmp.eq.s32.totalorder %s19, 1
      %p142 = scmp.ne.s32.totalorder %s137, %s139
      %p143 = scmp.eq.s32.totalorder %s19, 0
      %p144 = por %p142, %p143
      %p145 = scmp.ne.s32.totalorder %s137, %s139
      %p146 = scmp.eq.s32.totalorder %s24, 1
      %p147 = por %p145, %p146
      %p148 = scmp.ne.s32.totalorder %s139, %s140
      %p149 = scmp.eq.s32.totalorder %s24, 0
      %p150 = por %p148, %p149
      %p151 = scmp.ne.s32.totalorder %s139, %s140
      %p152 = scmp.eq.s32.totalorder %s25, 1
      %p153 = por %p151, %p152
      %p155 = scmp.ne.s32.totalorder %s140, %s154
      %p156 = scmp.eq.s32.totalorder %s25, 0
      %p157 = por %p155, %p156
      %s159 = sadd.s32 %s158, 1
      %p162 = scmp.eq.s32.totalorder %s19, 1
      %p163 = scmp.ne.s32.totalorder %s158, %s160
      %p164 = scmp.eq.s32.totalorder %s19, 0
      %p165 = por %p163, %p164
      %p166 = scmp.ne.s32.totalorder %s158, %s160
      %p167 = scmp.eq.s32.totalorder %s24, 1
      %p168 = por %p166, %p167
      %p169 = scmp.ne.s32.totalorder %s160, %s161
      %p170 = scmp.eq.s32.totalorder %s24, 0
      %p171 = por %p169, %p170
      %p172 = scmp.ne.s32.totalorder %s160, %s161
      %p173 = scmp.eq.s32.totalorder %s25, 1
      %p174 = por %p172, %p173
      %p176 = scmp.ne.s32.totalorder %s161, %s175
      %p177 = scmp.eq.s32.totalorder %s25, 0
      %p178 = por %p176, %p177
      %s179 = ssub.s32 %s19, %s26
      %p180 = scmp.eq.s32.totalorder %s179, 0
      %s182 = sadd.s32 %s181, 1
      %s183 = scalar_select %p180, %s181, %s182
      %p186 = pneg %p180
      %p187 = scmp.eq.s32.totalorder %s19, 1
      %p188 = por %p186, %p187
      %p189 = scmp.ne.s32.totalorder %s181, %s184
      %p190 = scmp.eq.s32.totalorder %s19, 0
      %p191 = por %p189, %p190
      %p192 = scmp.ne.s32.totalorder %s181, %s184
      %p193 = scmp.eq.s32.totalorder %s24, 1
      %p194 = por %p192, %p193
      %p195 = scmp.ne.s32.totalorder %s184, %s185
      %p196 = scmp.eq.s32.totalorder %s24, 0
      %p197 = por %p195, %p196
      %p198 = scmp.ne.s32.totalorder %s184, %s185
      %p199 = scmp.eq.s32.totalorder %s25, 1
      %p200 = por %p198, %p199
      %p202 = scmp.ne.s32.totalorder %s185, %s201
      %p203 = scmp.eq.s32.totalorder %s25, 0
      %p204 = por %p202, %p203
      %p205 = scmp.le.s32.totalorder 1, %s19
      %p206 = scmp.lt.s32.totalorder %s19, 3
      %p207 = pnand %p205, %p206
      %p208 = pneg %p207
      // Predicated region
      $region9: #{tpu_custom_call.1} parent=5 // pred_check
        _
      $region10: #{tpu_custom_call.1} parent=5 // pred_check_branch
        %210 = sbr.rel (%p207) target = $region12
      $region11: #{tpu_custom_call.1} parent=5 // pred_region
        %s211 = ssub.s32 %s19, 1
        // Predicated region
        $region13: #{tpu_custom_call.1} parent=11 // pred_check
          %p212 = pneg %p66
        $region14: #{tpu_custom_call.1} parent=11 // pred_check_branch
          %214 = sbr.rel (%p212) target = $region16
        $region15: #{tpu_custom_call.1} parent=11 // pred_region
          _
        $region16: #{tpu_custom_call.1} parent=11 // pred_fallthru
          _
        // Predicated region
        $region17: #{tpu_custom_call.1} parent=11 // pred_check
          %p215 = pneg %p87
        $region18: #{tpu_custom_call.1} parent=11 // pred_check_branch
          %217 = sbr.rel (%p215) target = $region20
        $region19: #{tpu_custom_call.1} parent=11 // pred_region
          _
        $region20: #{tpu_custom_call.1} parent=11 // pred_fallthru
          _
        // Predicated region
        $region21: #{tpu_custom_call.1} parent=11 // pred_check
          %p218 = pneg %p108
        $region22: #{tpu_custom_call.1} parent=11 // pred_check_branch
          %220 = sbr.rel (%p218) target = $region24
        $region23: #{tpu_custom_call.1} parent=11 // pred_region
          _
        $region24: #{tpu_custom_call.1} parent=11 // pred_fallthru
          _
        // Predicated region
        $region25: #{tpu_custom_call.1} parent=11 // pred_check
          %p221 = pneg %p129
        $region26: #{tpu_custom_call.1} parent=11 // pred_check_branch
          %223 = sbr.rel (%p221) target = $region28
        $region27: #{tpu_custom_call.1} parent=11 // pred_region
          _
        $region28: #{tpu_custom_call.1} parent=11 // pred_fallthru
          _
        // Predicated region
        $region29: #{tpu_custom_call.1} parent=11 // pred_check
          %p224 = pneg %p150
        $region30: #{tpu_custom_call.1} parent=11 // pred_check_branch
          %226 = sbr.rel (%p224) target = $region32
        $region31: #{tpu_custom_call.1} parent=11 // pred_region
          _
        $region32: #{tpu_custom_call.1} parent=11 // pred_fallthru
          _
        // Predicated region
        $region33: #{tpu_custom_call.1} parent=11 // pred_check
          %p227 = pneg %p171
        $region34: #{tpu_custom_call.1} parent=11 // pred_check_branch
          %229 = sbr.rel (%p227) target = $region36
        $region35: #{tpu_custom_call.1} parent=11 // pred_region
          _
        $region36: #{tpu_custom_call.1} parent=11 // pred_fallthru
          _
      $region12: #{tpu_custom_call.1} parent=5 // pred_fallthru
        _
      %p230 = scmp.lt.s32.totalorder %s19, 2
      // Predicated region
      $region37: #{tpu_custom_call.1} parent=5 // pred_check
        %p231 = pneg %p230
      $region38: #{tpu_custom_call.1} parent=5 // pred_check_branch
        %233 = sbr.rel (%p231) target = $region40
      $region39: #{tpu_custom_call.1} parent=5 // pred_region
        // Predicated region
        $region41: #{tpu_custom_call.1} parent=39 // pred_check
          %p234 = pneg %p39
        $region42: #{tpu_custom_call.1} parent=39 // pred_check_branch
          %236 = sbr.rel (%p234) target = $region44
        $region43: #{tpu_custom_call.1} parent=39 // pred_region
          %s237 = sand.u32 %s29, 1
          %s238 = scalar_lea.sflag [#allocation3], %s237
          %s239 = sand.u32 %s29, 1
          %s240 = smul.addr %s239, 64
          %s241 = scalar_lea.vmem [#allocation2], %s240
          %s242 = smul.u32 8, %s19
          %244 = vsyncadd %s238, 0
          %s245 = smul.addr %s242, 8
          %s246 = scalar_lea.hbm %s0, %s245
          %s248 = sshll.u32 %s246, 4
          %s249 = int_to_ptr.hbm [resolvable:$true] %s248
          %s250 = sshll.u32 %s241, 4
          %s251 = int_to_ptr.vmem [resolvable:$true] %s250
          %253 = dma.hbm_to_vmem [thread:$0]  %s249, 1024, %s251, %s238
        $region44: #{tpu_custom_call.1} parent=39 // pred_fallthru
          _
      $region40: #{tpu_custom_call.1} parent=5 // pred_fallthru
        _
      %p254 = scmp.le.s32.totalorder 1, %s19
      %p255 = scmp.lt.s32.totalorder %s19, 3
      %p256 = pnand %p254, %p255
      %p257 = pneg %p256
      // Predicated region
      $region45: #{tpu_custom_call.1} parent=5 // pred_check
        _
      $region46: #{tpu_custom_call.1} parent=5 // pred_check_branch
        %259 = sbr.rel (%p256) target = $region48
      $region47: #{tpu_custom_call.1} parent=5 // pred_region
        %s260 = ssub.s32 %s19, 1
        %s261 = sand.u32 %s32, 1
        %s262 = scalar_lea.sflag [#allocation3], %s261
        %s263 = sand.u32 %s32, 1
        %s264 = smul.addr %s263, 64
        %s265 = scalar_lea.vmem [#allocation2], %s264
        // Predicated region
        $region49: #{tpu_custom_call.1} parent=47 // pred_check
          %p266 = pneg %p45
        $region50: #{tpu_custom_call.1} parent=47 // pred_check_branch
          %268 = sbr.rel (%p266) target = $region52
        $region51: #{tpu_custom_call.1} parent=47 // pred_region
          %270 = dma.done %s262, 1024
        $region52: #{tpu_custom_call.1} parent=47 // pred_fallthru
          _
        %s271 = sand.u32 %s32, 1
        %s272 = scalar_lea.sflag [#allocation3], %s271
        %s273 = sand.u32 %s32, 1
        %s274 = smul.addr %s273, 64
        %s275 = scalar_lea.vmem [#allocation2], %s274
        %p276 = pneg %p45
        %p277 = pneg %p42
        %p278 = pneg %p66
        %p279 = pneg %p63
        %p280 = pneg %p87
        %p281 = pneg %p84
        %p282 = pneg %p108
        %p283 = pneg %p105
        %p284 = pneg %p129
        %p285 = pneg %p126
        %p286 = pneg %p150
        %p287 = pneg %p147
        %p288 = pneg %p171
        %p289 = pneg %p168
        %p290 = pneg %p197
        %p291 = pneg %p194
        %s292 = sand.u32 %s184, 1
        %s293 = scalar_lea.sflag [#allocation4], %s292
        %s294 = sand.u32 %s184, 1
        %s295 = smul.addr %s294, 64
        %s296 = scalar_lea.vmem [#allocation5], %s295
        %s297 = smul.u32 8, %s24
        %s298 = smul.u32 8, %s24
        %v300 = vld [vmem:[%s265] sm:$0xff]
        %v301 = vld [vmem:[%s265 + $0x8] sm:$0xff]
        %v302 = vld [vmem:[%s265 + $0x10] sm:$0xff]
        %v303 = vld [vmem:[%s265 + $0x18] sm:$0xff]
        %v304 = vld [vmem:[%s265 + $0x20] sm:$0xff]
        %v305 = vld [vmem:[%s265 + $0x28] sm:$0xff]
        %v306 = vld [vmem:[%s265 + $0x30] sm:$0xff]
        %v307 = vld [vmem:[%s265 + $0x38] sm:$0xff]
        %v308 = vpack.c.bf16 %v300, %v300
        %v309 = vpack.c.bf16 %v301, %v301
        %v310 = vpack.c.bf16 %v302, %v302
        %v311 = vpack.c.bf16 %v303, %v303
        %v312 = vpack.c.bf16 %v304, %v304
        %v313 = vpack.c.bf16 %v305, %v305
        %v314 = vpack.c.bf16 %v306, %v306
        %v315 = vpack.c.bf16 %v307, %v307
        %v316 = vld [vmem:[%s1] sm:$0xf]
        %v317 = vld [vmem:[%s1 + $0x4] sm:$0xf]
        %v318 = vld [vmem:[%s1 + $0x8] sm:$0xf]
        %v319 = vld [vmem:[%s1 + $0xc] sm:$0xf]
        %v320 = vld [vmem:[%s2] sm:$0xff]
        %v321 = vld [vmem:[%s2 + $0x8] sm:$0xff]
        %v322 = vld [vmem:[%s2 + $0x10] sm:$0xff]
        %v323 = vld [vmem:[%s2 + $0x18] sm:$0xff]
        %325 = vset.pattern.permute.xlu0 0
        %326 = vperm.xlu0 %325, %v320
        %v327 = vpop.permute.xlu0 %326
        %330 = vset.pattern.permute.xlu0 0
        %331 = vperm.xlu0 %330, %v321
        %v332 = vpop.permute.xlu0 %331
        %335 = vset.pattern.permute.xlu0 0
        %336 = vperm.xlu0 %335, %v322
        %v337 = vpop.permute.xlu0 %336
        %340 = vset.pattern.permute.xlu0 0
        %341 = vperm.xlu0 %340, %v323
        %v342 = vpop.permute.xlu0 %341
        %v348 = vunpack.c.l.b16 %v316
        %v349 = vunpack.c.l.b16 %v317
        %v350 = vunpack.c.l.b16 %v318
        %v351 = vunpack.c.l.b16 %v319
        %v352 = vpack.c.b16 %v349, %v348
        %v353 = vpack.c.b16 %v351, %v350
        %vm354 = vcmask 64512
        %v356 = vsel %vm354, %v352, 0
        %v359 = vsel %vm354, %v353, 0
        %vm361 = vcmask 1043456
        %v363 = vsel %vm361, %v308, 0
        %v366 = vsel %vm361, %v309, 0
        %v369 = vsel %vm361, %v310, 0
        %v372 = vsel %vm361, %v311, 0
        %v375 = vsel %vm361, %v312, 0
        %v378 = vsel %vm361, %v313, 0
        %v381 = vsel %vm361, %v314, 0
        %v384 = vsel %vm361, %v315, 0
        %386 = vmatpush.bf16.msra.mxu0 0
        %387 = vmatpush.bf16.msra.mxu0 0
        %388 = vmatpush.bf16.msra.mxu0 0
        %389 = vmatpush.bf16.msra.mxu0 0
        %390 = vmatpush.bf16.msra.mxu0 0
        %391 = vmatpush.bf16.msra.mxu0 0
        %392 = vmatpush.bf16.msra.mxu0 0
        %393 = vmatpush.bf16.msra.mxu0 %v363
        %394 = vmatmul.bf16.gmra.mxu0 %v356
        %v395 = vpop.f32.mrf.mxu0
        %v396 = vadd.f32 %v327, %v395
        %v397 = vpop.f32.mrf.mxu0
        %v398 = vadd.f32 %v332, %v397
        %399 = vmatmul.bf16.gmra.mxu0 %v359
        %v400 = vpop.f32.mrf.mxu0
        %v401 = vadd.f32 %v337, %v400
        %v402 = vpop.f32.mrf.mxu0
        %v403 = vadd.f32 %v342, %v402
        %404 = vdwg.mxu0
        %405 = vmatpush.bf16.msra.mxu0 0
        %406 = vmatpush.bf16.msra.mxu0 0
        %407 = vmatpush.bf16.msra.mxu0 0
        %408 = vmatpush.bf16.msra.mxu0 0
        %409 = vmatpush.bf16.msra.mxu0 0
        %410 = vmatpush.bf16.msra.mxu0 0
        %411 = vmatpush.bf16.msra.mxu0 0
        %412 = vmatpush.bf16.msra.mxu0 %v366
        %413 = vmatmul.bf16.gmra.mxu0 %v356
        %v414 = vpop.f32.mrf.mxu0
        %v415 = vadd.f32 %v327, %v414
        %v416 = vpop.f32.mrf.mxu0
        %v417 = vadd.f32 %v332, %v416
        %418 = vmatmul.bf16.gmra.mxu0 %v359
        %v419 = vpop.f32.mrf.mxu0
        %v420 = vadd.f32 %v337, %v419
        %v421 = vpop.f32.mrf.mxu0
        %v422 = vadd.f32 %v342, %v421
        %423 = vdwg.mxu0
        %424 = vmatpush.bf16.msra.mxu0 0
        %425 = vmatpush.bf16.msra.mxu0 0
        %426 = vmatpush.bf16.msra.mxu0 0
        %427 = vmatpush.bf16.msra.mxu0 0
        %428 = vmatpush.bf16.msra.mxu0 0
        %429 = vmatpush.bf16.msra.mxu0 0
        %430 = vmatpush.bf16.msra.mxu0 0
        %431 = vmatpush.bf16.msra.mxu0 %v369
        %432 = vmatmul.bf16.gmra.mxu0 %v356
        %v433 = vpop.f32.mrf.mxu0
        %v434 = vadd.f32 %v327, %v433
        %v435 = vpop.f32.mrf.mxu0
        %v436 = vadd.f32 %v332, %v435
        %437 = vmatmul.bf16.gmra.mxu0 %v359
        %v438 = vpop.f32.mrf.mxu0
        %v439 = vadd.f32 %v337, %v438
        %v440 = vpop.f32.mrf.mxu0
        %v441 = vadd.f32 %v342, %v440
        %442 = vdwg.mxu0
        %443 = vmatpush.bf16.msra.mxu0 0
        %444 = vmatpush.bf16.msra.mxu0 0
        %445 = vmatpush.bf16.msra.mxu0 0
        %446 = vmatpush.bf16.msra.mxu0 0
        %447 = vmatpush.bf16.msra.mxu0 0
        %448 = vmatpush.bf16.msra.mxu0 0
        %449 = vmatpush.bf16.msra.mxu0 0
        %450 = vmatpush.bf16.msra.mxu0 %v372
        %451 = vmatmul.bf16.gmra.mxu0 %v356
        %v452 = vpop.f32.mrf.mxu0
        %v453 = vadd.f32 %v327, %v452
        %v454 = vpop.f32.mrf.mxu0
        %v455 = vadd.f32 %v332, %v454
        %456 = vmatmul.bf16.gmra.mxu0 %v359
        %v457 = vpop.f32.mrf.mxu0
        %v458 = vadd.f32 %v337, %v457
        %v459 = vpop.f32.mrf.mxu0
        %v460 = vadd.f32 %v342, %v459
        %461 = vdwg.mxu0
        %462 = vmatpush.bf16.msra.mxu0 0
        %463 = vmatpush.bf16.msra.mxu0 0
        %464 = vmatpush.bf16.msra.mxu0 0
        %465 = vmatpush.bf16.msra.mxu0 0
        %466 = vmatpush.bf16.msra.mxu0 0
        %467 = vmatpush.bf16.msra.mxu0 0
        %468 = vmatpush.bf16.msra.mxu0 0
        %469 = vmatpush.bf16.msra.mxu0 %v375
        %470 = vmatmul.bf16.gmra.mxu0 %v356
        %v471 = vpop.f32.mrf.mxu0
        %v472 = vadd.f32 %v327, %v471
        %v473 = vpop.f32.mrf.mxu0
        %v474 = vadd.f32 %v332, %v473
        %475 = vmatmul.bf16.gmra.mxu0 %v359
        %v476 = vpop.f32.mrf.mxu0
        %v477 = vadd.f32 %v337, %v476
        %v478 = vpop.f32.mrf.mxu0
        %v479 = vadd.f32 %v342, %v478
        %480 = vdwg.mxu0
        %481 = vmatpush.bf16.msra.mxu0 0
        %482 = vmatpush.bf16.msra.mxu0 0
        %483 = vmatpush.bf16.msra.mxu0 0
        %484 = vmatpush.bf16.msra.mxu0 0
        %485 = vmatpush.bf16.msra.mxu0 0
        %486 = vmatpush.bf16.msra.mxu0 0
        %487 = vmatpush.bf16.msra.mxu0 0
        %488 = vmatpush.bf16.msra.mxu0 %v378
        %489 = vmatmul.bf16.gmra.mxu0 %v356
        %v490 = vpop.f32.mrf.mxu0
        %v491 = vadd.f32 %v327, %v490
        %v492 = vpop.f32.mrf.mxu0
        %v493 = vadd.f32 %v332, %v492
        %494 = vmatmul.bf16.gmra.mxu0 %v359
        %v495 = vpop.f32.mrf.mxu0
        %v496 = vadd.f32 %v337, %v495
        %v497 = vpop.f32.mrf.mxu0
        %v498 = vadd.f32 %v342, %v497
        %499 = vdwg.mxu0
        %500 = vmatpush.bf16.msra.mxu0 0
        %501 = vmatpush.bf16.msra.mxu0 0
        %502 = vmatpush.bf16.msra.mxu0 0
        %503 = vmatpush.bf16.msra.mxu0 0
        %504 = vmatpush.bf16.msra.mxu0 0
        %505 = vmatpush.bf16.msra.mxu0 0
        %506 = vmatpush.bf16.msra.mxu0 0
        %507 = vmatpush.bf16.msra.mxu0 %v381
        %508 = vmatmul.bf16.gmra.mxu0 %v356
        %v509 = vpop.f32.mrf.mxu0
        %v510 = vadd.f32 %v327, %v509
        %v511 = vpop.f32.mrf.mxu0
        %v512 = vadd.f32 %v332, %v511
        %513 = vmatmul.bf16.gmra.mxu0 %v359
        %v514 = vpop.f32.mrf.mxu0
        %v515 = vadd.f32 %v337, %v514
        %v516 = vpop.f32.mrf.mxu0
        %v517 = vadd.f32 %v342, %v516
        %518 = vdwg.mxu0
        %519 = vmatpush.bf16.msra.mxu0 0
        %520 = vmatpush.bf16.msra.mxu0 0
        %521 = vmatpush.bf16.msra.mxu0 0
        %522 = vmatpush.bf16.msra.mxu0 0
        %523 = vmatpush.bf16.msra.mxu0 0
        %524 = vmatpush.bf16.msra.mxu0 0
        %525 = vmatpush.bf16.msra.mxu0 0
        %526 = vmatpush.bf16.msra.mxu0 %v384
        %527 = vmatmul.bf16.gmra.mxu0 %v356
        %v528 = vpop.f32.mrf.mxu0
        %v529 = vadd.f32 %v327, %v528
        %v530 = vpop.f32.mrf.mxu0
        %v531 = vadd.f32 %v332, %v530
        %532 = vmatmul.bf16.gmra.mxu0 %v359
        %v533 = vpop.f32.mrf.mxu0
        %v534 = vadd.f32 %v337, %v533
        %v535 = vpop.f32.mrf.mxu0
        %v536 = vadd.f32 %v342, %v535
        %537 = vdwg.mxu0
        %v538 = vmax.f32 %v396, 0.0
        %v539 = vmax.f32 %v415, 0.0
        %v540 = vmax.f32 %v434, 0.0
        %v541 = vmax.f32 %v453, 0.0
        %v542 = vmax.f32 %v472, 0.0
        %v543 = vmax.f32 %v491, 0.0
        %v544 = vmax.f32 %v510, 0.0
        %v545 = vmax.f32 %v529, 0.0
        %v546 = vmax.f32 %v398, 0.0
        %v547 = vmax.f32 %v417, 0.0
        %v548 = vmax.f32 %v436, 0.0
        %v549 = vmax.f32 %v455, 0.0
        %v550 = vmax.f32 %v474, 0.0
        %v551 = vmax.f32 %v493, 0.0
        %v552 = vmax.f32 %v512, 0.0
        %v553 = vmax.f32 %v531, 0.0
        %v554 = vmax.f32 %v401, 0.0
        %v555 = vmax.f32 %v420, 0.0
        %v556 = vmax.f32 %v439, 0.0
        %v557 = vmax.f32 %v458, 0.0
        %v558 = vmax.f32 %v477, 0.0
        %v559 = vmax.f32 %v496, 0.0
        %v560 = vmax.f32 %v515, 0.0
        %v561 = vmax.f32 %v534, 0.0
        %v562 = vmax.f32 %v403, 0.0
        %v563 = vmax.f32 %v422, 0.0
        %v564 = vmax.f32 %v441, 0.0
        %v565 = vmax.f32 %v460, 0.0
        %v566 = vmax.f32 %v479, 0.0
        %v567 = vmax.f32 %v498, 0.0
        %v568 = vmax.f32 %v517, 0.0
        %v569 = vmax.f32 %v536, 0.0
        %v570 = vld [vmem:[%s3] sm:$0xf]
        %v571 = vld [vmem:[%s3 + $0x4] sm:$0xf]
        %v572 = vld [vmem:[%s3 + $0x8] sm:$0xf]
        %v573 = vld [vmem:[%s3 + $0xc] sm:$0xf]
        %v574 = vpack.c.bf16 %v546, %v538
        %v575 = vpack.c.bf16 %v547, %v539
        %v576 = vpack.c.bf16 %v548, %v540
        %v577 = vpack.c.bf16 %v549, %v541
        %v578 = vpack.c.bf16 %v550, %v542
        %v579 = vpack.c.bf16 %v551, %v543
        %v580 = vpack.c.bf16 %v552, %v544
        %v581 = vpack.c.bf16 %v553, %v545
        %v582 = vpack.c.bf16 %v562, %v554
        %v583 = vpack.c.bf16 %v563, %v555
        %v584 = vpack.c.bf16 %v564, %v556
        %v585 = vpack.c.bf16 %v565, %v557
        %v586 = vpack.c.bf16 %v566, %v558
        %v587 = vpack.c.bf16 %v567, %v559
        %v588 = vpack.c.bf16 %v568, %v560
        %v589 = vpack.c.bf16 %v569, %v561
        %v590 = vld [vmem:[%s4] sm:$0xff]
        %v591 = vld [vmem:[%s4 + $0x8] sm:$0xff]
        %v592 = vld [vmem:[%s4 + $0x10] sm:$0xff]
        %v593 = vld [vmem:[%s4 + $0x18] sm:$0xff]
        %595 = vset.pattern.permute.xlu0 0
        %596 = vperm.xlu0 %595, %v590
        %v597 = vpop.permute.xlu0 %596
        %600 = vset.pattern.permute.xlu0 0
        %601 = vperm.xlu0 %600, %v591
        %v602 = vpop.permute.xlu0 %601
        %605 = vset.pattern.permute.xlu0 0
        %606 = vperm.xlu0 %605, %v592
        %v607 = vpop.permute.xlu0 %606
        %610 = vset.pattern.permute.xlu0 0
        %611 = vperm.xlu0 %610, %v593
        %v612 = vpop.permute.xlu0 %611
        %v618 = vunpack.c.l.b16 %v570
        %v619 = vunpack.c.l.b16 %v571
        %v620 = vunpack.c.l.b16 %v572
        %v621 = vunpack.c.l.b16 %v573
        %v622 = vpack.c.b16 %v619, %v618
        %v623 = vpack.c.b16 %v621, %v620
        %vm624 = vcmask 261120
        %v626 = vsel %vm624, %v622, 0
        %v629 = vsel %vm624, %v623, 0
        %631 = vmatpush.bf16.msra.mxu0 0
        %632 = vmatpush.bf16.msra.mxu0 0
        %633 = vmatpush.bf16.msra.mxu0 0
        %634 = vmatpush.bf16.msra.mxu0 0
        %635 = vmatpush.bf16.msra.mxu0 0
        %636 = vmatpush.bf16.msra.mxu0 0
        %637 = vmatpush.bf16.msra.mxu0 %v582
        %638 = vmatpush.bf16.msra.mxu0 %v574
        %639 = vmatmul.bf16.gmra.mxu0 %v626
        %v640 = vpop.f32.mrf.mxu0
        %v641 = vadd.f32 %v597, %v640
        %v642 = vpop.f32.mrf.mxu0
        %v643 = vadd.f32 %v602, %v642
        %644 = vmatmul.bf16.gmra.mxu0 %v629
        %v645 = vpop.f32.mrf.mxu0
        %v646 = vadd.f32 %v607, %v645
        %v647 = vpop.f32.mrf.mxu0
        %v648 = vadd.f32 %v612, %v647
        %649 = vdwg.mxu0
        %650 = vmatpush.bf16.msra.mxu0 0
        %651 = vmatpush.bf16.msra.mxu0 0
        %652 = vmatpush.bf16.msra.mxu0 0
        %653 = vmatpush.bf16.msra.mxu0 0
        %654 = vmatpush.bf16.msra.mxu0 0
        %655 = vmatpush.bf16.msra.mxu0 0
        %656 = vmatpush.bf16.msra.mxu0 %v583
        %657 = vmatpush.bf16.msra.mxu0 %v575
        %658 = vmatmul.bf16.gmra.mxu0 %v626
        %v659 = vpop.f32.mrf.mxu0
        %v660 = vadd.f32 %v597, %v659
        %v661 = vpop.f32.mrf.mxu0
        %v662 = vadd.f32 %v602, %v661
        %663 = vmatmul.bf16.gmra.mxu0 %v629
        %v664 = vpop.f32.mrf.mxu0
        %v665 = vadd.f32 %v607, %v664
        %v666 = vpop.f32.mrf.mxu0
        %v667 = vadd.f32 %v612, %v666
        %668 = vdwg.mxu0
        %669 = vmatpush.bf16.msra.mxu0 0
        %670 = vmatpush.bf16.msra.mxu0 0
        %671 = vmatpush.bf16.msra.mxu0 0
        %672 = vmatpush.bf16.msra.mxu0 0
        %673 = vmatpush.bf16.msra.mxu0 0
        %674 = vmatpush.bf16.msra.mxu0 0
        %675 = vmatpush.bf16.msra.mxu0 %v584
        %676 = vmatpush.bf16.msra.mxu0 %v576
        %677 = vmatmul.bf16.gmra.mxu0 %v626
        %v678 = vpop.f32.mrf.mxu0
        %v679 = vadd.f32 %v597, %v678
        %v680 = vpop.f32.mrf.mxu0
        %v681 = vadd.f32 %v602, %v680
        %682 = vmatmul.bf16.gmra.mxu0 %v629
        %v683 = vpop.f32.mrf.mxu0
        %v684 = vadd.f32 %v607, %v683
        %v685 = vpop.f32.mrf.mxu0
        %v686 = vadd.f32 %v612, %v685
        %687 = vdwg.mxu0
        %688 = vmatpush.bf16.msra.mxu0 0
        %689 = vmatpush.bf16.msra.mxu0 0
        %690 = vmatpush.bf16.msra.mxu0 0
        %691 = vmatpush.bf16.msra.mxu0 0
        %692 = vmatpush.bf16.msra.mxu0 0
        %693 = vmatpush.bf16.msra.mxu0 0
        %694 = vmatpush.bf16.msra.mxu0 %v585
        %695 = vmatpush.bf16.msra.mxu0 %v577
        %696 = vmatmul.bf16.gmra.mxu0 %v626
        %v697 = vpop.f32.mrf.mxu0
        %v698 = vadd.f32 %v597, %v697
        %v699 = vpop.f32.mrf.mxu0
        %v700 = vadd.f32 %v602, %v699
        %701 = vmatmul.bf16.gmra.mxu0 %v629
        %v702 = vpop.f32.mrf.mxu0
        %v703 = vadd.f32 %v607, %v702
        %v704 = vpop.f32.mrf.mxu0
        %v705 = vadd.f32 %v612, %v704
        %706 = vdwg.mxu0
        %707 = vmatpush.bf16.msra.mxu0 0
        %708 = vmatpush.bf16.msra.mxu0 0
        %709 = vmatpush.bf16.msra.mxu0 0
        %710 = vmatpush.bf16.msra.mxu0 0
        %711 = vmatpush.bf16.msra.mxu0 0
        %712 = vmatpush.bf16.msra.mxu0 0
        %713 = vmatpush.bf16.msra.mxu0 %v586
        %714 = vmatpush.bf16.msra.mxu0 %v578
        %715 = vmatmul.bf16.gmra.mxu0 %v626
        %v716 = vpop.f32.mrf.mxu0
        %v717 = vadd.f32 %v597, %v716
        %v718 = vpop.f32.mrf.mxu0
        %v719 = vadd.f32 %v602, %v718
        %720 = vmatmul.bf16.gmra.mxu0 %v629
        %v721 = vpop.f32.mrf.mxu0
        %v722 = vadd.f32 %v607, %v721
        %v723 = vpop.f32.mrf.mxu0
        %v724 = vadd.f32 %v612, %v723
        %725 = vdwg.mxu0
        %726 = vmatpush.bf16.msra.mxu0 0
        %727 = vmatpush.bf16.msra.mxu0 0
        %728 = vmatpush.bf16.msra.mxu0 0
        %729 = vmatpush.bf16.msra.mxu0 0
        %730 = vmatpush.bf16.msra.mxu0 0
        %731 = vmatpush.bf16.msra.mxu0 0
        %732 = vmatpush.bf16.msra.mxu0 %v587
        %733 = vmatpush.bf16.msra.mxu0 %v579
        %734 = vmatmul.bf16.gmra.mxu0 %v626
        %v735 = vpop.f32.mrf.mxu0
        %v736 = vadd.f32 %v597, %v735
        %v737 = vpop.f32.mrf.mxu0
        %v738 = vadd.f32 %v602, %v737
        %739 = vmatmul.bf16.gmra.mxu0 %v629
        %v740 = vpop.f32.mrf.mxu0
        %v741 = vadd.f32 %v607, %v740
        %v742 = vpop.f32.mrf.mxu0
        %v743 = vadd.f32 %v612, %v742
        %744 = vdwg.mxu0
        %745 = vmatpush.bf16.msra.mxu0 0
        %746 = vmatpush.bf16.msra.mxu0 0
        %747 = vmatpush.bf16.msra.mxu0 0
        %748 = vmatpush.bf16.msra.mxu0 0
        %749 = vmatpush.bf16.msra.mxu0 0
        %750 = vmatpush.bf16.msra.mxu0 0
        %751 = vmatpush.bf16.msra.mxu0 %v588
        %752 = vmatpush.bf16.msra.mxu0 %v580
        %753 = vmatmul.bf16.gmra.mxu0 %v626
        %v754 = vpop.f32.mrf.mxu0
        %v755 = vadd.f32 %v597, %v754
        %v756 = vpop.f32.mrf.mxu0
        %v757 = vadd.f32 %v602, %v756
        %758 = vmatmul.bf16.gmra.mxu0 %v629
        %v759 = vpop.f32.mrf.mxu0
        %v760 = vadd.f32 %v607, %v759
        %v761 = vpop.f32.mrf.mxu0
        %v762 = vadd.f32 %v612, %v761
        %763 = vdwg.mxu0
        %764 = vmatpush.bf16.msra.mxu0 0
        %765 = vmatpush.bf16.msra.mxu0 0
        %766 = vmatpush.bf16.msra.mxu0 0
        %767 = vmatpush.bf16.msra.mxu0 0
        %768 = vmatpush.bf16.msra.mxu0 0
        %769 = vmatpush.bf16.msra.mxu0 0
        %770 = vmatpush.bf16.msra.mxu0 %v589
        %771 = vmatpush.bf16.msra.mxu0 %v581
        %772 = vmatmul.bf16.gmra.mxu0 %v626
        %v773 = vpop.f32.mrf.mxu0
        %v774 = vadd.f32 %v597, %v773
        %v775 = vpop.f32.mrf.mxu0
        %v776 = vadd.f32 %v602, %v775
        %777 = vmatmul.bf16.gmra.mxu0 %v629
        %v778 = vpop.f32.mrf.mxu0
        %v779 = vadd.f32 %v607, %v778
        %v780 = vpop.f32.mrf.mxu0
        %v781 = vadd.f32 %v612, %v780
        %782 = vdwg.mxu0
        %v783 = vmax.f32 %v641, 0.0
        %v784 = vmax.f32 %v660, 0.0
        %v785 = vmax.f32 %v679, 0.0
        %v786 = vmax.f32 %v698, 0.0
        %v787 = vmax.f32 %v717, 0.0
        %v788 = vmax.f32 %v736, 0.0
        %v789 = vmax.f32 %v755, 0.0
        %v790 = vmax.f32 %v774, 0.0
        %v791 = vmax.f32 %v643, 0.0
        %v792 = vmax.f32 %v662, 0.0
        %v793 = vmax.f32 %v681, 0.0
        %v794 = vmax.f32 %v700, 0.0
        %v795 = vmax.f32 %v719, 0.0
        %v796 = vmax.f32 %v738, 0.0
        %v797 = vmax.f32 %v757, 0.0
        %v798 = vmax.f32 %v776, 0.0
        %v799 = vmax.f32 %v646, 0.0
        %v800 = vmax.f32 %v665, 0.0
        %v801 = vmax.f32 %v684, 0.0
        %v802 = vmax.f32 %v703, 0.0
        %v803 = vmax.f32 %v722, 0.0
        %v804 = vmax.f32 %v741, 0.0
        %v805 = vmax.f32 %v760, 0.0
        %v806 = vmax.f32 %v779, 0.0
        %v807 = vmax.f32 %v648, 0.0
        %v808 = vmax.f32 %v667, 0.0
        %v809 = vmax.f32 %v686, 0.0
        %v810 = vmax.f32 %v705, 0.0
        %v811 = vmax.f32 %v724, 0.0
        %v812 = vmax.f32 %v743, 0.0
        %v813 = vmax.f32 %v762, 0.0
        %v814 = vmax.f32 %v781, 0.0
        %v815 = vld [vmem:[%s5] sm:$0xf]
        %v816 = vpack.c.bf16 %v791, %v783
        %v817 = vpack.c.bf16 %v792, %v784
        %v818 = vpack.c.bf16 %v793, %v785
        %v819 = vpack.c.bf16 %v794, %v786
        %v820 = vpack.c.bf16 %v795, %v787
        %v821 = vpack.c.bf16 %v796, %v788
        %v822 = vpack.c.bf16 %v797, %v789
        %v823 = vpack.c.bf16 %v798, %v790
        %v824 = vpack.c.bf16 %v807, %v799
        %v825 = vpack.c.bf16 %v808, %v800
        %v826 = vpack.c.bf16 %v809, %v801
        %v827 = vpack.c.bf16 %v810, %v802
        %v828 = vpack.c.bf16 %v811, %v803
        %v829 = vpack.c.bf16 %v812, %v804
        %v830 = vpack.c.bf16 %v813, %v805
        %v831 = vpack.c.bf16 %v814, %v806
        %v832 = vld [vmem:[%s6] sm:$0xff]
        %834 = vset.pattern.permute.xlu0 0
        %835 = vperm.xlu0 %834, %v832
        %v836 = vpop.permute.xlu0 %835
        %v839 = vsel %vm624, %v815, 0
        %841 = vmatpush.bf16.msra.mxu0 0
        %842 = vmatpush.bf16.msra.mxu0 0
        %843 = vmatpush.bf16.msra.mxu0 0
        %844 = vmatpush.bf16.msra.mxu0 0
        %845 = vmatpush.bf16.msra.mxu0 0
        %846 = vmatpush.bf16.msra.mxu0 0
        %847 = vmatpush.bf16.msra.mxu0 %v824
        %848 = vmatpush.bf16.msra.mxu0 %v816
        %849 = vmatmul.bf16.gmra.mxu0 %v839
        %v850 = vpop.f32.mrf.mxu0
        %v851 = vadd.f32 %v836, %v850
        %v852 = vpop.f32.mrf.mxu0
        %853 = vdwg.mxu0
        %854 = vmatpush.bf16.msra.mxu0 0
        %855 = vmatpush.bf16.msra.mxu0 0
        %856 = vmatpush.bf16.msra.mxu0 0
        %857 = vmatpush.bf16.msra.mxu0 0
        %858 = vmatpush.bf16.msra.mxu0 0
        %859 = vmatpush.bf16.msra.mxu0 0
        %860 = vmatpush.bf16.msra.mxu0 %v825
        %861 = vmatpush.bf16.msra.mxu0 %v817
        %862 = vmatmul.bf16.gmra.mxu0 %v839
        %v863 = vpop.f32.mrf.mxu0
        %v864 = vadd.f32 %v836, %v863
        %v865 = vpop.f32.mrf.mxu0
        %866 = vdwg.mxu0
        %867 = vmatpush.bf16.msra.mxu0 0
        %868 = vmatpush.bf16.msra.mxu0 0
        %869 = vmatpush.bf16.msra.mxu0 0
        %870 = vmatpush.bf16.msra.mxu0 0
        %871 = vmatpush.bf16.msra.mxu0 0
        %872 = vmatpush.bf16.msra.mxu0 0
        %873 = vmatpush.bf16.msra.mxu0 %v826
        %874 = vmatpush.bf16.msra.mxu0 %v818
        %875 = vmatmul.bf16.gmra.mxu0 %v839
        %v876 = vpop.f32.mrf.mxu0
        %v877 = vadd.f32 %v836, %v876
        %v878 = vpop.f32.mrf.mxu0
        %879 = vdwg.mxu0
        %880 = vmatpush.bf16.msra.mxu0 0
        %881 = vmatpush.bf16.msra.mxu0 0
        %882 = vmatpush.bf16.msra.mxu0 0
        %883 = vmatpush.bf16.msra.mxu0 0
        %884 = vmatpush.bf16.msra.mxu0 0
        %885 = vmatpush.bf16.msra.mxu0 0
        %886 = vmatpush.bf16.msra.mxu0 %v827
        %887 = vmatpush.bf16.msra.mxu0 %v819
        %888 = vmatmul.bf16.gmra.mxu0 %v839
        %v889 = vpop.f32.mrf.mxu0
        %v890 = vadd.f32 %v836, %v889
        %v891 = vpop.f32.mrf.mxu0
        %892 = vdwg.mxu0
        %893 = vmatpush.bf16.msra.mxu0 0
        %894 = vmatpush.bf16.msra.mxu0 0
        %895 = vmatpush.bf16.msra.mxu0 0
        %896 = vmatpush.bf16.msra.mxu0 0
        %897 = vmatpush.bf16.msra.mxu0 0
        %898 = vmatpush.bf16.msra.mxu0 0
        %899 = vmatpush.bf16.msra.mxu0 %v828
        %900 = vmatpush.bf16.msra.mxu0 %v820
        %901 = vmatmul.bf16.gmra.mxu0 %v839
        %v902 = vpop.f32.mrf.mxu0
        %v903 = vadd.f32 %v836, %v902
        %v904 = vpop.f32.mrf.mxu0
        %905 = vdwg.mxu0
        %906 = vmatpush.bf16.msra.mxu0 0
        %907 = vmatpush.bf16.msra.mxu0 0
        %908 = vmatpush.bf16.msra.mxu0 0
        %909 = vmatpush.bf16.msra.mxu0 0
        %910 = vmatpush.bf16.msra.mxu0 0
        %911 = vmatpush.bf16.msra.mxu0 0
        %912 = vmatpush.bf16.msra.mxu0 %v829
        %913 = vmatpush.bf16.msra.mxu0 %v821
        %914 = vmatmul.bf16.gmra.mxu0 %v839
        %v915 = vpop.f32.mrf.mxu0
        %v916 = vadd.f32 %v836, %v915
        %v917 = vpop.f32.mrf.mxu0
        %918 = vdwg.mxu0
        %919 = vmatpush.bf16.msra.mxu0 0
        %920 = vmatpush.bf16.msra.mxu0 0
        %921 = vmatpush.bf16.msra.mxu0 0
        %922 = vmatpush.bf16.msra.mxu0 0
        %923 = vmatpush.bf16.msra.mxu0 0
        %924 = vmatpush.bf16.msra.mxu0 0
        %925 = vmatpush.bf16.msra.mxu0 %v830
        %926 = vmatpush.bf16.msra.mxu0 %v822
        %927 = vmatmul.bf16.gmra.mxu0 %v839
        %v928 = vpop.f32.mrf.mxu0
        %v929 = vadd.f32 %v836, %v928
        %v930 = vpop.f32.mrf.mxu0
        %931 = vdwg.mxu0
        %932 = vmatpush.bf16.msra.mxu0 0
        %933 = vmatpush.bf16.msra.mxu0 0
        %934 = vmatpush.bf16.msra.mxu0 0
        %935 = vmatpush.bf16.msra.mxu0 0
        %936 = vmatpush.bf16.msra.mxu0 0
        %937 = vmatpush.bf16.msra.mxu0 0
        %938 = vmatpush.bf16.msra.mxu0 %v831
        %939 = vmatpush.bf16.msra.mxu0 %v823
        %940 = vmatmul.bf16.gmra.mxu0 %v839
        %v941 = vpop.f32.mrf.mxu0
        %v942 = vadd.f32 %v836, %v941
        %v943 = vpop.f32.mrf.mxu0
        %944 = vdwg.mxu0
        %v945 = vmax.f32 %v851, 0.0
        %v946 = vmax.f32 %v864, 0.0
        %v947 = vmax.f32 %v877, 0.0
        %v948 = vmax.f32 %v890, 0.0
        %v949 = vmax.f32 %v903, 0.0
        %v950 = vmax.f32 %v916, 0.0
        %v951 = vmax.f32 %v929, 0.0
        %v952 = vmax.f32 %v942, 0.0
        %v953 = vadd.f32 %v300, %v945
        %v954 = vadd.f32 %v301, %v946
        %v955 = vadd.f32 %v302, %v947
        %v956 = vadd.f32 %v303, %v948
        %v957 = vadd.f32 %v304, %v949
        %v958 = vadd.f32 %v305, %v950
        %v959 = vadd.f32 %v306, %v951
        %v960 = vadd.f32 %v307, %v952
        %961 = vst [vmem:[%s296] sm:$0xff] %v953
        %962 = vst [vmem:[%s296 + $0x8] sm:$0xff] %v954
        %963 = vst [vmem:[%s296 + $0x10] sm:$0xff] %v955
        %964 = vst [vmem:[%s296 + $0x18] sm:$0xff] %v956
        %965 = vst [vmem:[%s296 + $0x20] sm:$0xff] %v957
        %966 = vst [vmem:[%s296 + $0x28] sm:$0xff] %v958
        %967 = vst [vmem:[%s296 + $0x30] sm:$0xff] %v959
        %968 = vst [vmem:[%s296 + $0x38] sm:$0xff] %v960
        %s969 = sand.u32 %s184, 1
        %s970 = scalar_lea.sflag [#allocation4], %s969
        %s971 = sand.u32 %s184, 1
        %s972 = smul.addr %s971, 64
        %s973 = scalar_lea.vmem [#allocation5], %s972
        // Predicated region
        $region53: #{tpu_custom_call.1} parent=47 // pred_check
          %p974 = pneg %p194
        $region54: #{tpu_custom_call.1} parent=47 // pred_check_branch
          %976 = sbr.rel (%p974) target = $region56
        $region55: #{tpu_custom_call.1} parent=47 // pred_region
          %s977 = smul.u32 8, %s24
          %979 = vsyncadd %s970, 0
          %s980 = smul.addr %s977, 8
          %s981 = scalar_lea.hbm %s7, %s980
          %s983 = sshll.u32 %s973, 4
          %s984 = int_to_ptr.vmem [resolvable:$true] %s983
          %s985 = sshll.u32 %s981, 4
          %s986 = int_to_ptr.hbm [resolvable:$true] %s985
          %988 = dma.vmem_to_hbm [thread:$0]  %s984, 1024, %s986, %s970
        $region56: #{tpu_custom_call.1} parent=47 // pred_fallthru
          _
      $region48: #{tpu_custom_call.1} parent=5 // pred_fallthru
        _
      %p989 = scmp.le.s32.totalorder 2, %s19
      // Predicated region
      $region57: #{tpu_custom_call.1} parent=5 // pred_check
        %p990 = pneg %p989
      $region58: #{tpu_custom_call.1} parent=5 // pred_check_branch
        %992 = sbr.rel (%p990) target = $region60
      $region59: #{tpu_custom_call.1} parent=5 // pred_region
        %s993 = ssub.s32 %s19, 2
        // Predicated region
        $region61: #{tpu_custom_call.1} parent=59 // pred_check
          %p994 = pneg %p200
        $region62: #{tpu_custom_call.1} parent=59 // pred_check_branch
          %996 = sbr.rel (%p994) target = $region64
        $region63: #{tpu_custom_call.1} parent=59 // pred_region
          %s997 = sand.u32 %s185, 1
          %s998 = scalar_lea.sflag [#allocation4], %s997
          %s999 = sand.u32 %s185, 1
          %s1000 = smul.addr %s999, 64
          %s1001 = scalar_lea.vmem [#allocation5], %s1000
          %1003 = dma.done %s998, 1024
        $region64: #{tpu_custom_call.1} parent=59 // pred_fallthru
          _
      $region60: #{tpu_custom_call.1} parent=5 // pred_fallthru
        _
    $region6: #{tpu_custom_call.1} parent=1 // loop_footer
      %s23 = sadd.s32 1, %s19
    $region7: #{tpu_custom_call.1} parent=1 // loop_footer_branch
      %18 = sbr.rel target = $region3
    $region8: #{tpu_custom_call.1} parent=1 // loop_exit
      _
    %1004 = vsyncpa [#allocation3], 1
    %s1005 = scalar_lea.sflag [#allocation3], 1
    %1006 = vsyncpa %s1005, 1
    %1007 = vsyncpa [#allocation4], 1
    %s1008 = scalar_lea.sflag [#allocation4], 1
    %1009 = vsyncpa %s1008, 1

</llo_original>
